<compile_context>
chip_gen: v6e
topology: v6e:2x2x1
jax: 0.10.0
libtpu: 0.0.40
codegen_flags: <defaults>
</compile_context>

<pallas_src>
import math

import jax
import jax.numpy as jnp
from jax.experimental import pallas as pl
from jax.experimental.pallas import tpu as pltpu


# ----------------------------------------------------------------------------
# Kernels
# ----------------------------------------------------------------------------
def _pic2vector_packed_kernel(x_ref, o_ref):
    # x_ref: (C, RT*k) block, o_ref: (RT, k*C) block with k*C % 128 == 0.
    # out[r, j*C + c] == x[c, r*k + j]  ==  x.T.reshape(RT, k*C)
    rt, kc = o_ref.shape
    xt = x_ref[...].T                      # XLU transpose: (RT*k, C)
    o_ref[...] = xt.reshape(rt, kc)        # lane-dense (128-wide) store


def _pic2vector_plain_kernel(x_ref, o_ref):
    # x_ref: (C, HW_TILE) block, o_ref: (HW_TILE, C) block.
    o_ref[...] = x_ref[...].T


# ----------------------------------------------------------------------------
# Tile selection helpers
# ----------------------------------------------------------------------------
def _pick_tile(total, unit, limit):
    """Largest multiple of `unit` that divides `total` and is <= limit.

    Falls back to `total` (full extent, always a legal block dim) when
    `total` is not a multiple of `unit`.
    """
    if total % unit != 0:
        return total
    n = total // unit
    m_cap = max(1, min(n, limit // unit))
    for m in range(m_cap, 0, -1):
        if n % m == 0:
            return unit * m
    return unit


def _vmem_limit(block_elems, itemsize):
    # double-buffered in + out blocks (~4x) plus headroom for the in-VMEM
    # repack copy; clamp to stay within every generation's physical VMEM.
    return int(min(64 * 2**20, max(16 * 2**20, 6 * block_elems * itemsize)))


# ----------------------------------------------------------------------------
# Pallas-call wrappers
# ----------------------------------------------------------------------------
def _pic2vector_packed(x_flat, b, c, hw, k, vmem_budget_bytes):
    """Lane-dense path: output declared as (B, HW//k, k*C), k*C % 128 == 0."""
    dtype = x_flat.dtype
    itemsize = jnp.dtype(dtype).itemsize
    r = hw // k
    kc = k * c

    # Row-tile granularity so both blocks satisfy the (8, 128) rule:
    #   out block (rt, k*C): rt % 8 == 0      (k*C already % 128 == 0)
    #   in  block (C, rt*k): (rt*k) % 128 == 0
    need_in = 128 // math.gcd(k, 128)
    unit = (8 * need_in) // math.gcd(8, need_in)          # lcm(8, need_in)

    # Per grid step ~ 2(double-buffer) * 2(in+out) * rt*k*C*itemsize bytes.
    rows_budget = max(unit, vmem_budget_bytes // (4 * kc * itemsize))
    rt = _pick_tile(r, unit, rows_budget)                 # rt always divides r

    out = pl.pallas_call(
        _pic2vector_packed_kernel,
        out_shape=jax.ShapeDtypeStruct((b, r, kc), dtype),
        grid_spec=pltpu.PrefetchScalarGridSpec(
            num_scalar_prefetch=0,
            grid=(b, r // rt),
            in_specs=[
                pl.BlockSpec((pl.Squeezed(), c, rt * k), lambda i, j: (i, 0, j))
            ],
            out_specs=pl.BlockSpec((pl.Squeezed(), rt, kc), lambda i, j: (i, j, 0)),
        ),
        compiler_params=pltpu.CompilerParams(
            dimension_semantics=("parallel", "parallel"),
            vmem_limit_bytes=_vmem_limit(rt * kc, itemsize),
        ),
    )(x_flat)

    # (B, HW//k, k*C) is byte-identical (row-major) to (B, HW, C): free reshape.
    return out.reshape(b, hw, c)


def _pic2vector_plain(x_flat, b, c, hw, vmem_budget_bytes):
    """Fallback path: direct (C, HW_TILE) -> (HW_TILE, C) transpose blocks."""
    dtype = x_flat.dtype
    itemsize = jnp.dtype(dtype).itemsize

    cols_budget = max(128, vmem_budget_bytes // (4 * c * itemsize))
    hw_t = _pick_tile(hw, 128, cols_budget)               # hw_t always divides hw

    return pl.pallas_call(
        _pic2vector_plain_kernel,
        out_shape=jax.ShapeDtypeStruct((b, hw, c), dtype),
        grid_spec=pltpu.PrefetchScalarGridSpec(
            num_scalar_prefetch=0,
            grid=(b, hw // hw_t),
            in_specs=[
                pl.BlockSpec((pl.Squeezed(), c, hw_t), lambda i, j: (i, 0, j))
            ],
            out_specs=pl.BlockSpec((pl.Squeezed(), hw_t, c), lambda i, j: (i, j, 0)),
        ),
        compiler_params=pltpu.CompilerParams(
            dimension_semantics=("parallel", "parallel"),
            vmem_limit_bytes=_vmem_limit(hw_t * c, itemsize),
        ),
    )(x_flat)


def pic2vector(x, channel_size=None, *, vmem_budget_bytes=8 * 1024 * 1024):
    """x: (B, C, H, W) -> (B, H*W, C), matching Pic2Vector.forward."""
    b = x.shape[0]
    # Match the PyTorch module exactly: channel_size overrides shape[1] and the
    # reshape re-partitions accordingly (same behavior as torch's reshape).
    c = x.shape[1] if channel_size is None else channel_size
    x_flat = x.reshape(b, c, -1)           # metadata reshape in the wrapper
    hw = x_flat.shape[-1]

    if hw == 0 or c == 0:
        return jnp.zeros((b, hw, c), x.dtype)

    # Smallest k with (k*c) % 128 == 0 -> lane-dense output slabs.
    k = 128 // math.gcd(c, 128)
    if c % 128 != 0 and hw % k == 0:
        try:
            return _pic2vector_packed(x_flat, b, c, hw, k, vmem_budget_bytes)
        except Exception:
            # If the lane-dense repack fails to lower on this toolchain,
            # fall back to the (correct, tiled) plain transpose kernel.
            pass
    return _pic2vector_plain(x_flat, b, c, hw, vmem_budget_bytes)


# ----------------------------------------------------------------------------
# Self-test
# ----------------------------------------------------------------------------
if __name__ == "__main__":
    # Pic2Vector has no learnable parameters; only deterministic inputs needed.
    key = jax.random.PRNGKey(0)

    # Main shape from the module's typical use: (B, C, H, W) = (2, 4, 16, 16).
    B, C, H, W = 2, 4, 16, 16
    x = jax.random.normal(key, (B, C, H, W), dtype=jnp.float32)
    out = jax.block_until_ready(pic2vector(x))
    ref = jnp.swapaxes(x.reshape(B, C, H * W), -2, -1)
    assert out.shape == (B, H * W, C), out.shape
    assert jnp.array_equal(out, ref), "mismatch vs reference (main shape)"

    key2, key3 = jax.random.split(jax.random.PRNGKey(0))

    # Exercise the multi-tile spatial grid of the lane-dense path
    # (small VMEM budget forces >1 tile along HW).
    x2 = jax.random.normal(key2, (1, 8, 32, 64), dtype=jnp.float32)
    out2 = jax.block_until_ready(pic2vector(x2, vmem_budget_bytes=64 * 1024))
    ref2 = jnp.swapaxes(x2.reshape(1, 8, 32 * 64), -2, -1)
    assert jnp.array_equal(out2, ref2), "mismatch vs reference (tiled packed)"

    # Exercise the plain fallback path (C and HW not 128-alignable).
    x3 = jax.random.normal(key3, (2, 3, 10, 10), dtype=jnp.float32)
    out3 = jax.block_until_ready(pic2vector(x3))
    ref3 = jnp.swapaxes(x3.reshape(2, 3, 100), -2, -1)
    assert jnp.array_equal(out3, ref3), "mismatch vs reference (fallback)"

    print("KERNEL_OK")
</pallas_src>

<mosaic_0001>
module attributes {stable_mosaic.version = 11 : i64} {
  func.func @_pic2vector_packed_kernel(%arg0: i32, %arg1: i32, %arg2: memref<1x4x256xf32, #tpu.memory_space<vmem>>, %arg3: memref<1x8x128xf32, #tpu.memory_space<vmem>>) attributes {dimension_semantics = [#tpu.dimension_semantics<parallel>, #tpu.dimension_semantics<parallel>], iteration_bounds = array<i64: 2, 1>, scalar_prefetch = 0 : i64, scratch_operands = 0 : i64, tpu.core_type = #tpu.core_type<tc>, window_params = [{transform_indices = @transform_0, window_bounds = array<i64: 1, 4, 256>}, {transform_indices = @transform_1, window_bounds = array<i64: 1, 8, 128>}]} {
    %c0 = arith.constant 0 : index
    %c0_0 = arith.constant 0 : index
    %c0_1 = arith.constant 0 : index
    %0 = vector.load %arg2[%c0, %c0_0, %c0_1] : memref<1x4x256xf32, #tpu.memory_space<vmem>>, vector<1x4x256xf32>
    %1 = vector.shape_cast %0 : vector<1x4x256xf32> to vector<4x256xf32>
    %2 = tpu.transpose %1, [1, 0] : vector<4x256xf32> -> vector<256x4xf32>
    %3 = vector.shape_cast %2 : vector<256x4xf32> to vector<8x128xf32>
    %c0_2 = arith.constant 0 : index
    %c0_3 = arith.constant 0 : index
    %c0_4 = arith.constant 0 : index
    %4 = vector.load %arg3[%c0_2, %c0_3, %c0_4] : memref<1x8x128xf32, #tpu.memory_space<vmem>>, vector<1x8x128xf32>
    %5 = vector.shape_cast %4 : vector<1x8x128xf32> to vector<8x128xf32>
    %6 = vector.shape_cast %3 : vector<8x128xf32> to vector<1x8x128xf32>
    tpu.vector_store %arg3[%c0_2, %c0_3, %c0_4], %6 {strides = array<i32>} : memref<1x8x128xf32, #tpu.memory_space<vmem>>, vector<1x8x128xf32>,
    return
  }
  func.func @transform_0(%arg0: i32, %arg1: i32) -> (i32, i32, i32) {
    %c0_i32 = arith.constant 0 : i32
    %c0_i32_0 = arith.constant 0 : i32
    return %arg0, %c0_i32, %arg1 : i32, i32, i32
  }
  func.func @transform_1(%arg0: i32, %arg1: i32) -> (i32, i32, i32) {
    %c0_i32 = arith.constant 0 : i32
    %c0_i32_0 = arith.constant 0 : i32
    return %arg0, %arg1, %c0_i32 : i32, i32, i32
  }
}

module attributes {stable_mosaic.version = 11 : i64} {
  func.func @_pic2vector_plain_kernel(%arg0: i32, %arg1: i32, %arg2: memref<1x4x256xf32, #tpu.memory_space<vmem>>, %arg3: memref<1x256x4xf32, #tpu.memory_space<vmem>>) attributes {dimension_semantics = [#tpu.dimension_semantics<parallel>, #tpu.dimension_semantics<parallel>], iteration_bounds = array<i64: 2, 1>, scalar_prefetch = 0 : i64, scratch_operands = 0 : i64, tpu.core_type = #tpu.core_type<tc>, window_params = [{transform_indices = @transform_0, window_bounds = array<i64: 1, 4, 256>}, {transform_indices = @transform_1, window_bounds = array<i64: 1, 256, 4>}]} {
    %c0 = arith.constant 0 : index
    %c0_0 = arith.constant 0 : index
    %c0_1 = arith.constant 0 : index
    %0 = vector.load %arg2[%c0, %c0_0, %c0_1] : memref<1x4x256xf32, #tpu.memory_space<vmem>>, vector<1x4x256xf32>
    %1 = vector.shape_cast %0 : vector<1x4x256xf32> to vector<4x256xf32>
    %2 = tpu.transpose %1, [1, 0] : vector<4x256xf32> -> vector<256x4xf32>
    %c0_2 = arith.constant 0 : index
    %c0_3 = arith.constant 0 : index
    %c0_4 = arith.constant 0 : index
    %3 = vector.load %arg3[%c0_2, %c0_3, %c0_4] : memref<1x256x4xf32, #tpu.memory_space<vmem>>, vector<1x256x4xf32>
    %4 = vector.shape_cast %3 : vector<1x256x4xf32> to vector<256x4xf32>
    %5 = vector.shape_cast %2 : vector<256x4xf32> to vector<1x256x4xf32>
    tpu.vector_store %arg3[%c0_2, %c0_3, %c0_4], %5 {strides = array<i32>} : memref<1x256x4xf32, #tpu.memory_space<vmem>>, vector<1x256x4xf32>,
    return
  }
  func.func @transform_0(%arg0: i32, %arg1: i32) -> (i32, i32, i32) {
    %c0_i32 = arith.constant 0 : i32
    %c0_i32_0 = arith.constant 0 : i32
    return %arg0, %c0_i32, %arg1 : i32, i32, i32
  }
  func.func @transform_1(%arg0: i32, %arg1: i32) -> (i32, i32, i32) {
    %c0_i32 = arith.constant 0 : i32
    %c0_i32_0 = arith.constant 0 : i32
    return %arg0, %arg1, %c0_i32 : i32, i32, i32
  }
}

</mosaic_0001>

<llo_original>
// kernel: tpu_custom_call.1
$region0: #{tpu_custom_call.1}
  #allocation0 [shape = 'u32[]', space=smem, size = 0x4, offset = 0x4, fixed_abs, tag = 'smem constant byte address 0x4 - core index']
  #allocation1 [shape = 'u32[144,128]{1,0:T(1,128)}', space=vmem, size = 0x12000, scoped, tag = 'internal scratch']
  %s0 = inlined_call_operand.hbm [shape: f32[2,4,256], index: 0, kind: input, shape index: {}]
  %s1 = inlined_call_operand.vmem [shape: f32[2,256,4], index: 1, kind: output, shape index: {}]
  %s2 = sld [smem:[#allocation0]]
  $region41: #{tpu_custom_call.1} parent=0
    _
  %s4 = ssub.s32 1, %s2
  %s5 = scalar_select 0, %s4, %s2
  $region1: #{tpu_custom_call.1} parent=0
    #allocation2 [shape = 'u8[8192]{0}', space=vmem, size = 0x2000, scoped, tag = 'input window, operand 0']
    #allocation3 [shape = 's32[2]{0}', space=sflag, size = 0x8, scoped, tag = 'scoped memory for tpu_custom_call.1']
    %6 = vsyncpa [#allocation3], 0
    %s7 = scalar_lea.sflag [#allocation3], 1
    %8 = vsyncpa %s7, 0
    loop: start=0, step=1, limit=4
    $region2: #{tpu_custom_call.1} parent=1 // loop_pre_header
      _
    $region3: #{tpu_custom_call.1} parent=1 // loop_header
      %s10 = sphi 0, %s14
      %p11 = scmp.ge.s32.totalorder %s10, 4
      %s17 = sphi 0, %s29
      %s18 = sphi 0, %s25
      %s19 = sphi 0, %s17
      %s20 = sphi 0, %s18
      %s21 = sphi 0, %s19
      %s22 = sphi 0, %s20
      %s34 = sphi 0, %s36
      %s37 = sphi 0, %s34
      %s38 = sphi 0, %s37
      %s54 = sphi 0, %s38
      %s62 = sphi 0, %s64
      %s65 = sphi 0, %s62
      %s66 = sphi 0, %s65
      %s82 = sphi 0, %s66
    $region4: #{tpu_custom_call.1} parent=1 // loop_header_branch
      %13 = sbr.rel (%p11) target = $region8
    $region5: #{tpu_custom_call.1} parent=1 // loop_body
      %s15 = ssub.s32 %s10, 1
      %s16 = ssub.s32 %s10, 2
      %s23 = sadd.s32 1, %s18
      %p24 = scmp.ge.s32.totalorder %s23, 1
      %s25 = scalar_select %p24, 0, %s23
      %s26 = sadd.s32 1, %s17
      %s27 = scalar_select %p24, %s26, %s17
      %p28 = scmp.ge.s32.totalorder %s27, 2
      %s29 = scalar_select %p28, 0, %s27
      %s30 = ssub.s32 %s17, %s29
      %s31 = ssub.s32 %s18, %s25
      %s32 = sor.u32 %s30, %s31
      %p33 = scmp.eq.s32.totalorder %s32, 0
      %s35 = sadd.s32 %s34, 1
      %s36 = scalar_select %p33, %s34, %s35
      %p39 = pneg %p33
      %p40 = scmp.eq.s32.totalorder %s10, 1
      %p41 = por %p39, %p40
      %p42 = scmp.ne.s32.totalorder %s34, %s37
      %p43 = scmp.eq.s32.totalorder %s10, 0
      %p44 = por %p42, %p43
      %p45 = scmp.ne.s32.totalorder %s34, %s37
      %p46 = scmp.eq.s32.totalorder %s15, 1
      %p47 = por %p45, %p46
      %p48 = scmp.ne.s32.totalorder %s37, %s38
      %p49 = scmp.eq.s32.totalorder %s15, 0
      %p50 = por %p48, %p49
      %p51 = scmp.ne.s32.totalorder %s37, %s38
      %p52 = scmp.eq.s32.totalorder %s16, 1
      %p53 = por %p51, %p52
      %p55 = scmp.ne.s32.totalorder %s38, %s54
      %p56 = scmp.eq.s32.totalorder %s16, 0
      %p57 = por %p55, %p56
      %s58 = ssub.s32 %s17, %s29
      %s59 = ssub.s32 %s18, %s25
      %s60 = sor.u32 %s58, %s59
      %p61 = scmp.eq.s32.totalorder %s60, 0
      %s63 = sadd.s32 %s62, 1
      %s64 = scalar_select %p61, %s62, %s63
      %p67 = pneg %p61
      %p68 = scmp.eq.s32.totalorder %s10, 1
      %p69 = por %p67, %p68
      %p70 = scmp.ne.s32.totalorder %s62, %s65
      %p71 = scmp.eq.s32.totalorder %s10, 0
      %p72 = por %p70, %p71
      %p73 = scmp.ne.s32.totalorder %s62, %s65
      %p74 = scmp.eq.s32.totalorder %s15, 1
      %p75 = por %p73, %p74
      %p76 = scmp.ne.s32.totalorder %s65, %s66
      %p77 = scmp.eq.s32.totalorder %s15, 0
      %p78 = por %p76, %p77
      %p79 = scmp.ne.s32.totalorder %s65, %s66
      %p80 = scmp.eq.s32.totalorder %s16, 1
      %p81 = por %p79, %p80
      %p83 = scmp.ne.s32.totalorder %s66, %s82
      %p84 = scmp.eq.s32.totalorder %s16, 0
      %p85 = por %p83, %p84
      %p86 = scmp.le.s32.totalorder 1, %s10
      %p87 = scmp.lt.s32.totalorder %s10, 3
      %p88 = pnand %p86, %p87
      %p89 = pneg %p88
      // Predicated region
      $region9: #{tpu_custom_call.1} parent=5 // pred_check
        _
      $region10: #{tpu_custom_call.1} parent=5 // pred_check_branch
        %91 = sbr.rel (%p88) target = $region12
      $region11: #{tpu_custom_call.1} parent=5 // pred_region
        %s92 = ssub.s32 %s10, 1
      $region12: #{tpu_custom_call.1} parent=5 // pred_fallthru
        _
      %p93 = scmp.lt.s32.totalorder %s10, 2
      // Predicated region
      $region13: #{tpu_custom_call.1} parent=5 // pred_check
        %p94 = pneg %p93
      $region14: #{tpu_custom_call.1} parent=5 // pred_check_branch
        %96 = sbr.rel (%p94) target = $region16
      $region15: #{tpu_custom_call.1} parent=5 // pred_region
        // Predicated region
        $region17: #{tpu_custom_call.1} parent=15 // pred_check
          %p97 = pneg %p44
        $region18: #{tpu_custom_call.1} parent=15 // pred_check_branch
          %99 = sbr.rel (%p97) target = $region20
        $region19: #{tpu_custom_call.1} parent=15 // pred_region
          %s100 = sand.u32 %s34, 1
          %s101 = scalar_lea.sflag [#allocation3], %s100
          %s102 = sand.u32 %s34, 1
          %s103 = smul.addr %s102, 8
          %s104 = scalar_lea.vmem [#allocation2], %s103
          %s105 = smul.u32 2, %s18
          %s107 = ssub.s32 128, 128
          %108 = vsyncadd %s101, %s107
          %s109 = smul.addr %s17, 2
          %s110 = sadd.s32 %s105, %s109
          %s111 = smul.addr %s110, 64
          %s112 = scalar_lea.hbm %s0, %s111
          %s114 = sshll.u32 %s104, 4
          %s115 = int_to_ptr.vmem [resolvable:$true] %s114
          %117 = dma.hbm_to_vmem [thread:$0]  %s112, 128, %s115, %s101
        $region20: #{tpu_custom_call.1} parent=15 // pred_fallthru
          _
      $region16: #{tpu_custom_call.1} parent=5 // pred_fallthru
        _
      %p118 = scmp.le.s32.totalorder 1, %s10
      %p119 = scmp.lt.s32.totalorder %s10, 3
      %p120 = pnand %p118, %p119
      %p121 = pneg %p120
      // Predicated region
      $region21: #{tpu_custom_call.1} parent=5 // pred_check
        _
      $region22: #{tpu_custom_call.1} parent=5 // pred_check_branch
        %123 = sbr.rel (%p120) target = $region24
      $region23: #{tpu_custom_call.1} parent=5 // pred_region
        %s124 = ssub.s32 %s10, 1
        %s125 = sand.u32 %s37, 1
        %s126 = scalar_lea.sflag [#allocation3], %s125
        %s127 = sand.u32 %s37, 1
        %s128 = smul.addr %s127, 8
        %s129 = scalar_lea.vmem [#allocation2], %s128
        // Predicated region
        $region25: #{tpu_custom_call.1} parent=23 // pred_check
          %p130 = pneg %p50
        $region26: #{tpu_custom_call.1} parent=23 // pred_check_branch
          %132 = sbr.rel (%p130) target = $region28
        $region27: #{tpu_custom_call.1} parent=23 // pred_region
          %133 = dma.done %s126, 128
        $region28: #{tpu_custom_call.1} parent=23 // pred_fallthru
          _
        %s134 = sand.u32 %s37, 1
        %s135 = scalar_lea.sflag [#allocation3], %s134
        %s136 = sand.u32 %s37, 1
        %s137 = smul.addr %s136, 8
        %s138 = scalar_lea.vmem [#allocation2], %s137
        %p139 = pneg %p50
        %p140 = pneg %p47
        %p141 = pneg %p78
        %p142 = pneg %p75
        %s143 = smul.u32 32, %s20
        %p144 = scmp.lt.s32.totalorder %s19, 1
        %s145 = scalar_select %p144, %s19, 1
        %p146 = scmp.lt.s32.totalorder %s143, 31
        %s147 = scalar_select %p146, %s143, 31
        %s148 = smul.addr %s145, 32
        %s149 = sadd.s32 %s147, %s148
        %s150 = smul.addr %s149, 8
        %s151 = scalar_lea.vmem %s1, %s150
        %s152 = smul.u32 2, %s20
        %s153 = smul.u32 32, %s20
        %p154 = scmp.lt.s32.totalorder %s19, 1
        %s155 = scalar_select %p154, %s19, 1
        %p156 = scmp.lt.s32.totalorder %s153, 31
        %s157 = scalar_select %p156, %s153, 31
        %s158 = smul.addr %s155, 32
        %s159 = sadd.s32 %s157, %s158
        %s160 = smul.addr %s159, 8
        %s161 = scalar_lea.vmem %s1, %s160
        %s162 = smul.u32 32, %s20
        %v163 = vld [vmem:[%s129] sm:$0xff]
        %v165 = vcombine.high %v163, %v163
        %167 = vxpose.xlu0.b32.start [1/16] %v163, 128
        %168 = vxpose.xlu0.b32.cont [2/16] 0.0, 128
        %169 = vxpose.xlu0.b32.cont [3/16] 0.0, 128
        %170 = vxpose.xlu0.b32.cont [4/16] 0.0, 128
        %171 = vxpose.xlu0.b32.cont [5/16] 0.0, 128
        %172 = vxpose.xlu0.b32.cont [6/16] 0.0, 128
        %173 = vxpose.xlu0.b32.cont [7/16] 0.0, 128
        %174 = vxpose.xlu0.b32.cont [8/16] 0.0, 128
        %175 = vxpose.xlu0.b32.cont [9/16] 0.0, 128
        %176 = vxpose.xlu0.b32.cont [10/16] 0.0, 128
        %177 = vxpose.xlu0.b32.cont [11/16] 0.0, 128
        %178 = vxpose.xlu0.b32.cont [12/16] 0.0, 128
        %179 = vxpose.xlu0.b32.cont [13/16] 0.0, 128
        %180 = vxpose.xlu0.b32.cont [14/16] 0.0, 128
        %181 = vxpose.xlu0.b32.cont [15/16] 0.0, 128
        %182 = vxpose.xlu0.b32.end [16/16] 0.0, 128
        %v183 = vpop.trf.xlu0
        %v184 = vpop.trf.xlu0
        %v185 = vpop.trf.xlu0
        %v186 = vpop.trf.xlu0
        %v187 = vpop.trf.xlu0
        %v188 = vpop.trf.xlu0
        %v189 = vpop.trf.xlu0
        %v190 = vpop.trf.xlu0
        %v191 = vpop.trf.xlu0
        %v192 = vpop.trf.xlu0
        %v193 = vpop.trf.xlu0
        %v194 = vpop.trf.xlu0
        %v195 = vpop.trf.xlu0
        %v196 = vpop.trf.xlu0
        %v197 = vpop.trf.xlu0
        %v198 = vpop.trf.xlu0
        %199 = vxpose.xlu0.b32.start [1/16] %v165, 128
        %200 = vxpose.xlu0.b32.cont [2/16] 0.0, 128
        %201 = vxpose.xlu0.b32.cont [3/16] 0.0, 128
        %202 = vxpose.xlu0.b32.cont [4/16] 0.0, 128
        %203 = vxpose.xlu0.b32.cont [5/16] 0.0, 128
        %204 = vxpose.xlu0.b32.cont [6/16] 0.0, 128
        %205 = vxpose.xlu0.b32.cont [7/16] 0.0, 128
        %206 = vxpose.xlu0.b32.cont [8/16] 0.0, 128
        %207 = vxpose.xlu0.b32.cont [9/16] 0.0, 128
        %208 = vxpose.xlu0.b32.cont [10/16] 0.0, 128
        %209 = vxpose.xlu0.b32.cont [11/16] 0.0, 128
        %210 = vxpose.xlu0.b32.cont [12/16] 0.0, 128
        %211 = vxpose.xlu0.b32.cont [13/16] 0.0, 128
        %212 = vxpose.xlu0.b32.cont [14/16] 0.0, 128
        %213 = vxpose.xlu0.b32.cont [15/16] 0.0, 128
        %214 = vxpose.xlu0.b32.end [16/16] 0.0, 128
        %v215 = vpop.trf.xlu0
        %v216 = vpop.trf.xlu0
        %v217 = vpop.trf.xlu0
        %v218 = vpop.trf.xlu0
        %v219 = vpop.trf.xlu0
        %v220 = vpop.trf.xlu0
        %v221 = vpop.trf.xlu0
        %v222 = vpop.trf.xlu0
        %v223 = vpop.trf.xlu0
        %v224 = vpop.trf.xlu0
        %v225 = vpop.trf.xlu0
        %v226 = vpop.trf.xlu0
        %v227 = vpop.trf.xlu0
        %v228 = vpop.trf.xlu0
        %v229 = vpop.trf.xlu0
        %v230 = vpop.trf.xlu0
        %vm231 = vcmask 31744
        %232 = vst.msk [vmem:[%s161] sm:$0xff] %vm231, %v183
        %233 = vst.msk [vmem:[%s161 + $0x8] sm:$0xff] %vm231, %v184
        %234 = vst.msk [vmem:[%s161 + $0x10] sm:$0xff] %vm231, %v185
        %235 = vst.msk [vmem:[%s161 + $0x18] sm:$0xff] %vm231, %v186
        %236 = vst.msk [vmem:[%s161 + $0x20] sm:$0xff] %vm231, %v187
        %237 = vst.msk [vmem:[%s161 + $0x28] sm:$0xff] %vm231, %v188
        %238 = vst.msk [vmem:[%s161 + $0x30] sm:$0xff] %vm231, %v189
        %239 = vst.msk [vmem:[%s161 + $0x38] sm:$0xff] %vm231, %v190
        %240 = vst.msk [vmem:[%s161 + $0x40] sm:$0xff] %vm231, %v191
        %241 = vst.msk [vmem:[%s161 + $0x48] sm:$0xff] %vm231, %v192
        %242 = vst.msk [vmem:[%s161 + $0x50] sm:$0xff] %vm231, %v193
        %243 = vst.msk [vmem:[%s161 + $0x58] sm:$0xff] %vm231, %v194
        %244 = vst.msk [vmem:[%s161 + $0x60] sm:$0xff] %vm231, %v195
        %245 = vst.msk [vmem:[%s161 + $0x68] sm:$0xff] %vm231, %v196
        %246 = vst.msk [vmem:[%s161 + $0x70] sm:$0xff] %vm231, %v197
        %247 = vst.msk [vmem:[%s161 + $0x78] sm:$0xff] %vm231, %v198
        %248 = vst.msk [vmem:[%s161 + $0x80] sm:$0xff] %vm231, %v215
        %249 = vst.msk [vmem:[%s161 + $0x88] sm:$0xff] %vm231, %v216
        %250 = vst.msk [vmem:[%s161 + $0x90] sm:$0xff] %vm231, %v217
        %251 = vst.msk [vmem:[%s161 + $0x98] sm:$0xff] %vm231, %v218
        %252 = vst.msk [vmem:[%s161 + $0xa0] sm:$0xff] %vm231, %v219
        %253 = vst.msk [vmem:[%s161 + $0xa8] sm:$0xff] %vm231, %v220
        %254 = vst.msk [vmem:[%s161 + $0xb0] sm:$0xff] %vm231, %v221
        %255 = vst.msk [vmem:[%s161 + $0xb8] sm:$0xff] %vm231, %v222
        %256 = vst.msk [vmem:[%s161 + $0xc0] sm:$0xff] %vm231, %v223
        %257 = vst.msk [vmem:[%s161 + $0xc8] sm:$0xff] %vm231, %v224
        %258 = vst.msk [vmem:[%s161 + $0xd0] sm:$0xff] %vm231, %v225
        %259 = vst.msk [vmem:[%s161 + $0xd8] sm:$0xff] %vm231, %v226
        %260 = vst.msk [vmem:[%s161 + $0xe0] sm:$0xff] %vm231, %v227
        %261 = vst.msk [vmem:[%s161 + $0xe8] sm:$0xff] %vm231, %v228
        %262 = vst.msk [vmem:[%s161 + $0xf0] sm:$0xff] %vm231, %v229
        %263 = vst.msk [vmem:[%s161 + $0xf8] sm:$0xff] %vm231, %v230
        %s264 = smul.u32 32, %s20
        %p265 = scmp.lt.s32.totalorder %s19, 1
        %s266 = scalar_select %p265, %s19, 1
        %p267 = scmp.lt.s32.totalorder %s264, 31
        %s268 = scalar_select %p267, %s264, 31
        %s269 = smul.addr %s266, 32
        %s270 = sadd.s32 %s268, %s269
        %s271 = smul.addr %s270, 8
        %s272 = scalar_lea.vmem %s1, %s271
        // Predicated region
        $region29: #{tpu_custom_call.1} parent=23 // pred_check
          %p273 = pneg %p75
        $region30: #{tpu_custom_call.1} parent=23 // pred_check_branch
          %275 = sbr.rel (%p273) target = $region32
        $region31: #{tpu_custom_call.1} parent=23 // pred_region
          %s276 = smul.u32 32, %s20
        $region32: #{tpu_custom_call.1} parent=23 // pred_fallthru
          _
      $region24: #{tpu_custom_call.1} parent=5 // pred_fallthru
        _
      %p277 = scmp.le.s32.totalorder 2, %s10
      // Predicated region
      $region33: #{tpu_custom_call.1} parent=5 // pred_check
        %p278 = pneg %p277
      $region34: #{tpu_custom_call.1} parent=5 // pred_check_branch
        %280 = sbr.rel (%p278) target = $region36
      $region35: #{tpu_custom_call.1} parent=5 // pred_region
        %s281 = ssub.s32 %s10, 2
        // Predicated region
        $region37: #{tpu_custom_call.1} parent=35 // pred_check
          %p282 = pneg %p81
        $region38: #{tpu_custom_call.1} parent=35 // pred_check_branch
          %284 = sbr.rel (%p282) target = $region40
        $region39: #{tpu_custom_call.1} parent=35 // pred_region
          %s285 = smul.u32 32, %s22
          %p286 = scmp.lt.s32.totalorder %s21, 1
          %s287 = scalar_select %p286, %s21, 1
          %p288 = scmp.lt.s32.totalorder %s285, 31
          %s289 = scalar_select %p288, %s285, 31
          %s290 = smul.addr %s287, 32
          %s291 = sadd.s32 %s289, %s290
          %s292 = smul.addr %s291, 8
          %s293 = scalar_lea.vmem %s1, %s292
        $region40: #{tpu_custom_call.1} parent=35 // pred_fallthru
          _
      $region36: #{tpu_custom_call.1} parent=5 // pred_fallthru
        _
    $region6: #{tpu_custom_call.1} parent=1 // loop_footer
      %s14 = sadd.s32 1, %s10
    $region7: #{tpu_custom_call.1} parent=1 // loop_footer_branch
      %9 = sbr.rel target = $region3
    $region8: #{tpu_custom_call.1} parent=1 // loop_exit
      _
    %294 = vsyncpa [#allocation3], 1
    %s295 = scalar_lea.sflag [#allocation3], 1
    %296 = vsyncpa %s295, 1

</llo_original>
